<compile_context>
chip_gen: v6e
topology: v6e:2x2x1
jax: 0.10.0
libtpu: 0.0.40
codegen_flags: <defaults>
</compile_context>

<pallas_src>
import jax
import jax.numpy as jnp
import numpy as np
from jax.experimental import pallas as pl
from jax.experimental.pallas import tpu as pltpu  # noqa: F401 (kept for CompilerParams at scale)

PI = float(np.pi)

N_QUBITS = 4
DIM = 2 ** N_QUBITS          # 16
TWO_DIM = 2 * DIM            # 32: stacked [real; imag] rows
BATCH = 256                  # logical batch of states
LANE = 128                   # batch padded to a multiple of the 128-lane width


def _variational_layer_kernel(gate_ref, sr_ref, si_ref, or_ref, oi_ref):
    """Single whole-slab real block-matmul.

    gate_ref : (2*DIM, 2*DIM)  block matrix [[Ur, -Ui], [Ui, Ur]] of the fused
               n-qubit operator.
    sr_ref   : (DIM, Bp)  real part of the flattened state (Bp = padded batch).
    si_ref   : (DIM, Bp)  imag part of the flattened state.
    or_ref   : (DIM, Bp)  real part of the output state.
    oi_ref   : (DIM, Bp)  imag part of the output state.
    """
    # Stack [real; imag] once in VMEM (DIM is a multiple of the 8-row sublane
    # tile, so this is an aligned copy), then one MXU push.
    s = jnp.concatenate([sr_ref[...], si_ref[...]], axis=0)          # (2*DIM, Bp)
    out = jnp.dot(gate_ref[...], s, preferred_element_type=jnp.float32)
    or_ref[...] = out[:DIM, :]
    oi_ref[...] = out[DIM:, :]


def variational_layer_apply(gate_blk, sr, si):
    """pallas_call wrapper: one block covering the whole padded batch slab."""
    dim, bp = sr.shape
    return pl.pallas_call(
        _variational_layer_kernel,
        out_shape=(jax.ShapeDtypeStruct((dim, bp), jnp.float32),
                   jax.ShapeDtypeStruct((dim, bp), jnp.float32)),
        in_specs=[
            pl.BlockSpec((TWO_DIM, TWO_DIM), lambda: (0, 0)),
            pl.BlockSpec((dim, bp), lambda: (0, 0)),
            pl.BlockSpec((dim, bp), lambda: (0, 0)),
        ],
        out_specs=(
            pl.BlockSpec((dim, bp), lambda: (0, 0)),
            pl.BlockSpec((dim, bp), lambda: (0, 0)),
        ),
    )(gate_blk, sr, si)


# ---------- glue: parameter / gate setup (plain JAX, inside the same jit) ----------
def rx_2x2(theta):
    c = jnp.cos(theta / 2.0).astype(jnp.complex64)
    s = jnp.sin(theta / 2.0).astype(jnp.complex64)
    eye = jnp.eye(2, dtype=jnp.complex64)
    x = jnp.array([[0.0, 1.0], [1.0, 0.0]], dtype=jnp.complex64)
    return c * eye - 1j * s * x


def fused_layer_operator(thetas):
    """kron(RX(t0), ..., RX(t_{n-1})) with qubit 0 as MSB == sequential layer."""
    u = rx_2x2(thetas[0, 0])
    for q in range(1, N_QUBITS):
        u = jnp.kron(u, rx_2x2(thetas[q, 0]))
    return u  # (DIM, DIM) complex64


@jax.jit
def variational_layer_forward(thetas, state):
    """state: complex64, shape [2]*n_qubits + [batch] (pyqtorch layout)."""
    batch = state.shape[-1]
    flat = state.reshape(DIM, batch)
    sr = jnp.real(flat).astype(jnp.float32)
    si = jnp.imag(flat).astype(jnp.float32)

    # Lane-dense padding of the batch axis (no-op for BATCH=256).
    pad = (-batch) % LANE
    if pad:
        sr = jnp.pad(sr, ((0, 0), (0, pad)))
        si = jnp.pad(si, ((0, 0), (0, pad)))

    # Fused operator and its real block-matrix form.
    u = fused_layer_operator(thetas)
    ur = jnp.real(u).astype(jnp.float32)
    ui = jnp.imag(u).astype(jnp.float32)
    gate_blk = jnp.block([[ur, -ui], [ui, ur]])               # (2*DIM, 2*DIM)

    out_r, out_i = variational_layer_apply(gate_blk, sr, si)
    out_r = out_r[:, :batch]
    out_i = out_i[:, :batch]
    return (out_r + 1j * out_i).astype(jnp.complex64).reshape(state.shape)


if __name__ == "__main__":
    key = jax.random.PRNGKey(0)
    k_theta, k_re, k_im = jax.random.split(key, 3)

    # Deterministic parameter init, matching reset_parameters():
    # thetas ~ U(-2*pi, 2*pi), shape (n_qubits, Op.n_params) with n_params = 1.
    thetas = jax.random.uniform(k_theta, (N_QUBITS, 1),
                                minval=-2.0 * PI, maxval=2.0 * PI,
                                dtype=jnp.float32)

    # Input state: random normalized complex state, shape [2]*n_qubits + [batch].
    sr = jax.random.normal(k_re, (DIM, BATCH), dtype=jnp.float32)
    si = jax.random.normal(k_im, (DIM, BATCH), dtype=jnp.float32)
    norm = jnp.sqrt(jnp.sum(sr * sr + si * si, axis=0, keepdims=True))
    sr = sr / norm
    si = si / norm
    state = (sr + 1j * si).astype(jnp.complex64).reshape([2] * N_QUBITS + [BATCH])

    out_state = variational_layer_forward(thetas, state)
    out_state = jax.block_until_ready(out_state)

    # Pure-JAX reference with pyqtorch semantics: contract each single-qubit
    # gate with axis q of the [2]*n + [batch] state tensor, sequentially.
    ref = state
    for q in range(N_QUBITS):
        u = rx_2x2(thetas[q, 0])
        ref = jnp.moveaxis(jnp.tensordot(u, ref, axes=([1], [q])), 0, q)

    np.testing.assert_allclose(np.asarray(out_state), np.asarray(ref),
                               rtol=1e-5, atol=1e-5)
    print("KERNEL_OK")
</pallas_src>

<mosaic_0001>
module attributes {stable_mosaic.version = 11 : i64} {
  func.func @_variational_layer_kernel(%arg0: memref<32x32xf32, #tpu.memory_space<vmem>>, %arg1: memref<16x256xf32, #tpu.memory_space<vmem>>, %arg2: memref<16x256xf32, #tpu.memory_space<vmem>>, %arg3: memref<16x256xf32, #tpu.memory_space<vmem>>, %arg4: memref<16x256xf32, #tpu.memory_space<vmem>>) attributes {dimension_semantics = [], scalar_prefetch = 0 : i64, scratch_operands = 0 : i64, tpu.core_type = #tpu.core_type<tc>} {
    %c0 = arith.constant 0 : index
    %c0_0 = arith.constant 0 : index
    %0 = vector.load %arg1[%c0, %c0_0] : memref<16x256xf32, #tpu.memory_space<vmem>>, vector<16x256xf32>
    %c0_1 = arith.constant 0 : index
    %c0_2 = arith.constant 0 : index
    %1 = vector.load %arg2[%c0_1, %c0_2] : memref<16x256xf32, #tpu.memory_space<vmem>>, vector<16x256xf32>
    %2 = tpu.concatenate %0, %1 in 0 : vector<16x256xf32>, vector<16x256xf32> -> vector<32x256xf32>
    %c0_3 = arith.constant 0 : index
    %c0_4 = arith.constant 0 : index
    %3 = vector.load %arg0[%c0_3, %c0_4] : memref<32x32xf32, #tpu.memory_space<vmem>>, vector<32x32xf32>
    %cst = arith.constant dense<0.000000e+00> : vector<32x256xf32>
    %4 = tpu.matmul %3, %2, %cst {dimension_numbers = #tpu.dot_dimension_numbers<[1], [0], [0], [1], [0, 0, 1, 1], [], []>} : vector<32x32xf32>, vector<32x256xf32>, vector<32x256xf32> -> vector<32x256xf32>
    %5 = vector.extract_strided_slice %4 {offsets = [0, 0], sizes = [16, 256], strides = [1, 1]} : vector<32x256xf32> to vector<16x256xf32>
    %c0_5 = arith.constant 0 : index
    %c0_6 = arith.constant 0 : index
    %6 = vector.load %arg3[%c0_5, %c0_6] : memref<16x256xf32, #tpu.memory_space<vmem>>, vector<16x256xf32>
    tpu.vector_store %arg3[%c0_5, %c0_6], %5 {strides = array<i32>} : memref<16x256xf32, #tpu.memory_space<vmem>>, vector<16x256xf32>,
    %7 = vector.extract_strided_slice %4 {offsets = [16, 0], sizes = [16, 256], strides = [1, 1]} : vector<32x256xf32> to vector<16x256xf32>
    %c0_7 = arith.constant 0 : index
    %c0_8 = arith.constant 0 : index
    %8 = vector.load %arg4[%c0_7, %c0_8] : memref<16x256xf32, #tpu.memory_space<vmem>>, vector<16x256xf32>
    tpu.vector_store %arg4[%c0_7, %c0_8], %7 {strides = array<i32>} : memref<16x256xf32, #tpu.memory_space<vmem>>, vector<16x256xf32>,
    return
  }
}

</mosaic_0001>

<llo_original>
// kernel: neg.1
$region0: #{neg.1}
  #allocation0 [shape = 's32[1]{0}', space=sflag, size = 0x4, scoped, tag = 'scoped memory for neg.1']
  %s0 = inlined_call_operand.vmem [shape: f32[16,16], index: 0, kind: input, shape index: {}]
  %s1 = inlined_call_operand.vmem [shape: f32[16,16], index: 1, kind: output, shape index: {}]
  %v2 = vld [vmem:[%s0] sm:$0xff]
  %3 = xla_tuple %v2
  %4 = xla_tuple %3
  %v5 = vxor.u32 %v2, 2147483648
  %6 = xla_tuple %v5
  %7 = vst [vmem:[%s1] sm:$0xff] %v5
  %s8 = scalar_lea.vmem %s0, 8
  %v9 = vld [vmem:[%s8] sm:$0xff]
  %10 = xla_tuple %v9
  %11 = xla_tuple %10
  %v12 = vxor.u32 %v9, 2147483648
  %13 = xla_tuple %v12
  %s14 = scalar_lea.vmem %s1, 8
  %15 = vst [vmem:[%s14] sm:$0xff] %v12

// kernel: custom-call.1
$region0: #{custom-call.1}
  %s0 = inlined_call_operand.hbm [shape: c64[2,2,2,2,256], index: 0, kind: input, shape index: {}]
  %s1 = inlined_call_operand.vmem [shape: f32[2,2,2,2,256], index: 1, kind: output, shape index: {}]
  %s2 = scalar_lea.hbm %s0, 512
  $region1: #{custom-call.1} parent=0
    #allocation0 [shape = 's32[1]{0}', space=sflag, size = 0x4, scoped, tag = 'scoped memory for custom-call.1']
    %3 = vsyncpa [#allocation0], 0
    %s4 = sshll.u32 %s1, 4
    %s5 = int_to_ptr.vmem [resolvable:$true] %s4
    %7 = dma.hbm_to_vmem [thread:$0]  %s2, 512, %s5, [#allocation0]
    %8 = dma.done [#allocation0], 512
    %9 = vsyncpa [#allocation0], 1

// kernel: custom-call
$region0: #{custom-call}
  %s0 = inlined_call_operand.hbm [shape: c64[2,2,2,2,256], index: 0, kind: input, shape index: {}]
  %s1 = inlined_call_operand.vmem [shape: f32[2,2,2,2,256], index: 1, kind: output, shape index: {}]
  $region1: #{custom-call} parent=0
    #allocation0 [shape = 's32[1]{0}', space=sflag, size = 0x4, scoped, tag = 'scoped memory for custom-call']
    %2 = vsyncpa [#allocation0], 0
    %s3 = sshll.u32 %s1, 4
    %s4 = int_to_ptr.vmem [resolvable:$true] %s3
    %6 = dma.hbm_to_vmem [thread:$0]  %s0, 512, %s4, [#allocation0]
    %7 = dma.done [#allocation0], 512
    %8 = vsyncpa [#allocation0], 1

// kernel: custom-call.2
$region0: #{custom-call.2}
  %s0 = inlined_call_operand.vmem [shape: f32[2,2,2,2,256], index: 0, kind: input, shape index: {}]
  %s1 = inlined_call_operand.vmem [shape: f32[2,2,2,2,256], index: 1, kind: input, shape index: {}]
  %s2 = inlined_call_operand.hbm [shape: c64[2,2,2,2,256], index: 2, kind: output, shape index: {}]
  %s3 = scalar_lea.hbm %s2, 512
  $region1: #{custom-call.2} parent=0
    #allocation0 [shape = 's32[1]{0}', space=sflag, size = 0x4, scoped, tag = 'scoped memory for custom-call.2']
    %4 = vsyncpa [#allocation0], 0
    %s5 = sshll.u32 %s0, 4
    %s6 = int_to_ptr.vmem [resolvable:$true] %s5
    %8 = dma.vmem_to_hbm [thread:$0]  %s6, 512, %s2, [#allocation0]
    %9 = dma.done [#allocation0], 512
    %10 = vsyncpa [#allocation0], 1
  $region2: #{custom-call.2} parent=0
    #allocation1 [shape = 's32[1]{0}', space=sflag, size = 0x4, scoped, tag = 'scoped memory for custom-call.2']
    %11 = vsyncpa [#allocation1], 0
    %s12 = sshll.u32 %s1, 4
    %s13 = int_to_ptr.vmem [resolvable:$true] %s12
    %15 = dma.vmem_to_hbm [thread:$0]  %s13, 512, %s3, [#allocation1]
    %16 = dma.done [#allocation1], 512
    %17 = vsyncpa [#allocation1], 1

// kernel: variational_layer_forward.1
$region0: #{variational_layer_forward.1}
  #allocation0 [shape = 'u32[]', space=smem, size = 0x4, offset = 0x4, fixed_abs, tag = 'smem constant byte address 0x4 - core index']
  #allocation1 [shape = 'u32[144,128]{1,0:T(1,128)}', space=vmem, size = 0x12000, scoped, tag = 'internal scratch']
  %s0 = inlined_call_operand.vmem [shape: f32[32,32], index: 0, kind: input, shape index: {}]
  %s1 = inlined_call_operand.vmem [shape: f32[16,256], index: 1, kind: input, shape index: {}]
  %s2 = inlined_call_operand.vmem [shape: f32[16,256], index: 2, kind: input, shape index: {}]
  %s3 = inlined_call_operand.vmem [shape: f32[16,256], index: 3, kind: output, shape index: {0}]
  %s4 = inlined_call_operand.vmem [shape: f32[16,256], index: 4, kind: output, shape index: {1}]
  %5 = xla_tuple %s3, %s4
  %s6 = sld [smem:[#allocation0]]
  $region30: #{variational_layer_forward.1} parent=0
    _
  %s8 = ssub.s32 1, %s6
  %s9 = scalar_select 0, %s8, %s6
  // Predicated region
  $region2: #{variational_layer_forward.1} parent=0 // pred_check
    _
  $region3: #{variational_layer_forward.1} parent=0 // pred_check_branch
    %11 = sbr.rel (0) target = $region5
  $region4: #{variational_layer_forward.1} parent=0 // pred_region
    _
  $region5: #{variational_layer_forward.1} parent=0 // pred_fallthru
    _
  // Predicated region
  $region6: #{variational_layer_forward.1} parent=0 // pred_check
    _
  $region7: #{variational_layer_forward.1} parent=0 // pred_check_branch
    %13 = sbr.rel (0) target = $region9
  $region8: #{variational_layer_forward.1} parent=0 // pred_region
    _
  $region9: #{variational_layer_forward.1} parent=0 // pred_fallthru
    _
  // Predicated region
  $region10: #{variational_layer_forward.1} parent=0 // pred_check
    _
  $region11: #{variational_layer_forward.1} parent=0 // pred_check_branch
    %15 = sbr.rel (0) target = $region13
  $region12: #{variational_layer_forward.1} parent=0 // pred_region
    _
  $region13: #{variational_layer_forward.1} parent=0 // pred_fallthru
    _
  %v16 = vld [vmem:[%s1] sm:$0xff]
  %v17 = vld [vmem:[%s1 + $0x8] sm:$0xff]
  %v18 = vld [vmem:[%s1 + $0x10] sm:$0xff]
  %v19 = vld [vmem:[%s1 + $0x18] sm:$0xff]
  %v20 = vld [vmem:[%s2] sm:$0xff]
  %v21 = vld [vmem:[%s2 + $0x8] sm:$0xff]
  %v22 = vld [vmem:[%s2 + $0x10] sm:$0xff]
  %v23 = vld [vmem:[%s2 + $0x18] sm:$0xff]
  %v24 = vld [vmem:[%s0] sm:$0xff]
  %v25 = vld [vmem:[%s0 + $0x8] sm:$0xff]
  %v26 = vld [vmem:[%s0 + $0x10] sm:$0xff]
  %v27 = vld [vmem:[%s0 + $0x18] sm:$0xff]
  %vm28 = vcmask 261120
  %v30 = vsel %vm28, %v24, 0
  %v33 = vsel %vm28, %v25, 0
  %v36 = vsel %vm28, %v26, 0
  %v39 = vsel %vm28, %v27, 0
  %41 = vmatprep.subr.mxu0 0.0
  %42 = vmatpush1.msra.mxu0 0.0
  %43 = vmatprep.subr.mxu0 0.0
  %44 = vmatpush1.msra.mxu0 0.0
  %45 = vmatprep.subr.mxu0 0.0
  %46 = vmatpush1.msra.mxu0 0.0
  %47 = vmatprep.subr.mxu0 0.0
  %48 = vmatpush1.msra.mxu0 0.0
  %49 = vmatprep.subr.mxu0 0.0
  %50 = vmatpush1.msra.mxu0 0.0
  %51 = vmatprep.subr.mxu0 0.0
  %52 = vmatpush1.msra.mxu0 0.0
  %53 = vmatprep.subr.mxu0 0.0
  %54 = vmatpush1.msra.mxu0 0.0
  %55 = vmatprep.subr.mxu0 0.0
  %56 = vmatpush1.msra.mxu0 0.0
  %57 = vmatprep.subr.mxu0 0.0
  %58 = vmatpush1.msra.mxu0 0.0
  %59 = vmatprep.subr.mxu0 0.0
  %60 = vmatpush1.msra.mxu0 0.0
  %61 = vmatprep.subr.mxu0 0.0
  %62 = vmatpush1.msra.mxu0 0.0
  %63 = vmatprep.subr.mxu0 0.0
  %64 = vmatpush1.msra.mxu0 0.0
  %65 = vmatprep.subr.mxu0 %v23
  %66 = vmatpush1.msra.mxu0 %v22
  %67 = vmatprep.subr.mxu0 %v21
  %68 = vmatpush1.msra.mxu0 %v20
  %69 = vmatprep.subr.mxu0 %v19
  %70 = vmatpush1.msra.mxu0 %v18
  %71 = vmatprep.subr.mxu0 %v17
  %72 = vmatpush1.msra.mxu0 %v16
  %73 = vmatprep.subr.mxu0 0.0
  %74 = vmatpush2.msra.mxu0 0.0
  %75 = vmatprep.subr.mxu0 0.0
  %76 = vmatpush2.msra.mxu0 0.0
  %77 = vmatprep.subr.mxu0 0.0
  %78 = vmatpush2.msra.mxu0 0.0
  %79 = vmatprep.subr.mxu0 0.0
  %80 = vmatpush2.msra.mxu0 0.0
  %81 = vmatprep.subr.mxu0 0.0
  %82 = vmatpush2.msra.mxu0 0.0
  %83 = vmatprep.subr.mxu0 0.0
  %84 = vmatpush2.msra.mxu0 0.0
  %85 = vmatprep.subr.mxu0 0.0
  %86 = vmatpush2.msra.mxu0 0.0
  %87 = vmatprep.subr.mxu0 0.0
  %88 = vmatpush2.msra.mxu0 0.0
  %89 = vmatprep.subr.mxu0 0.0
  %90 = vmatpush2.msra.mxu0 0.0
  %91 = vmatprep.subr.mxu0 0.0
  %92 = vmatpush2.msra.mxu0 0.0
  %93 = vmatprep.subr.mxu0 0.0
  %94 = vmatpush2.msra.mxu0 0.0
  %95 = vmatprep.subr.mxu0 0.0
  %96 = vmatpush2.msra.mxu0 0.0
  %97 = vmatprep.subr.mxu0 0.0
  %98 = vmatpush2.msra.mxu0 0.0
  %99 = vmatprep.subr.mxu0 0.0
  %100 = vmatpush2.msra.mxu0 0.0
  %101 = vmatprep.subr.mxu0 0.0
  %102 = vmatpush2.msra.mxu0 0.0
  %103 = vmatprep.subr.mxu0 0.0
  %104 = vmatpush2.msra.mxu0 0.0
  %105 = vmatprep.mubr.f32.mxu0 0.0
  %106 = vmatmul.mubr.f32.gmra.mxu0 %v30
  %v107 = vpop.f32.mrf.mxu0
  %v108 = vadd.f32 0.0, %v107
  %v109 = vpop.f32.mrf.mxu0
  %v110 = vadd.f32 0.0, %v109
  %111 = vmatprep.mubr.f32.mxu0 0.0
  %112 = vmatmul.mubr.f32.gmra.mxu0 %v33
  %v113 = vpop.f32.mrf.mxu0
  %v114 = vadd.f32 0.0, %v113
  %v115 = vpop.f32.mrf.mxu0
  %v116 = vadd.f32 0.0, %v115
  %117 = vmatprep.mubr.f32.mxu0 0.0
  %118 = vmatmul.mubr.f32.gmra.mxu0 %v36
  %v119 = vpop.f32.mrf.mxu0
  %v120 = vadd.f32 0.0, %v119
  %v121 = vpop.f32.mrf.mxu0
  %v122 = vadd.f32 0.0, %v121
  %123 = vmatprep.mubr.f32.mxu0 0.0
  %124 = vmatmul.mubr.f32.gmra.mxu0 %v39
  %v125 = vpop.f32.mrf.mxu0
  %v126 = vadd.f32 0.0, %v125
  %v127 = vpop.f32.mrf.mxu0
  %v128 = vadd.f32 0.0, %v127
  %129 = vdwg.mxu0
  %130 = vst [vmem:[%s3] sm:$0xff] %v108
  %131 = vst [vmem:[%s3 + $0x8] sm:$0xff] %v110
  %132 = vst [vmem:[%s3 + $0x10] sm:$0xff] %v114
  %133 = vst [vmem:[%s3 + $0x18] sm:$0xff] %v116
  %134 = vst [vmem:[%s4] sm:$0xff] %v120
  %135 = vst [vmem:[%s4 + $0x8] sm:$0xff] %v122
  %136 = vst [vmem:[%s4 + $0x10] sm:$0xff] %v126
  %137 = vst [vmem:[%s4 + $0x18] sm:$0xff] %v128
  // Predicated region
  $region14: #{variational_layer_forward.1} parent=0 // pred_check
    _
  $region15: #{variational_layer_forward.1} parent=0 // pred_check_branch
    %139 = sbr.rel (0) target = $region17
  $region16: #{variational_layer_forward.1} parent=0 // pred_region
    _
  $region17: #{variational_layer_forward.1} parent=0 // pred_fallthru
    _
  // Predicated region
  $region18: #{variational_layer_forward.1} parent=0 // pred_check
    _
  $region19: #{variational_layer_forward.1} parent=0 // pred_check_branch
    %141 = sbr.rel (0) target = $region21
  $region20: #{variational_layer_forward.1} parent=0 // pred_region
    _
  $region21: #{variational_layer_forward.1} parent=0 // pred_fallthru
    _
  // Predicated region
  $region22: #{variational_layer_forward.1} parent=0 // pred_check
    _
  $region23: #{variational_layer_forward.1} parent=0 // pred_check_branch
    %143 = sbr.rel (0) target = $region25
  $region24: #{variational_layer_forward.1} parent=0 // pred_region
    _
  $region25: #{variational_layer_forward.1} parent=0 // pred_fallthru
    _
  // Predicated region
  $region26: #{variational_layer_forward.1} parent=0 // pred_check
    _
  $region27: #{variational_layer_forward.1} parent=0 // pred_check_branch
    %145 = sbr.rel (0) target = $region29
  $region28: #{variational_layer_forward.1} parent=0 // pred_region
    _
  $region29: #{variational_layer_forward.1} parent=0 // pred_fallthru
    _

</llo_original>
